<compile_context>
chip_gen: v6e
topology: v6e:2x2x1
jax: 0.10.0
libtpu: 0.0.40
codegen_flags: <defaults>
</compile_context>

<pallas_src>
import jax
import jax.numpy as jnp
from jax import lax
from jax.experimental import pallas as pl
from jax.experimental.pallas import tpu as pltpu


def _round_up(x: int, m: int) -> int:
    return (x + m - 1) // m * m


def _gather_onehot_kernel(ids_ref, w_ref, out_ref):
    """Gather rows of a VMEM-resident codebook via a one-hot MXU matmul.

    ids_ref: (TB, 1) int32 block of token ids (VMEM).
    w_ref:   (V, Dp) full codebook, resident in VMEM (same block every step).
    out_ref: (TB, Dp) output block.
    """
    tb = out_ref.shape[0]
    v = w_ref.shape[0]
    ids = ids_ref[...]                                      # (TB, 1)
    iota = lax.broadcasted_iota(jnp.int32, (tb, v), 1)      # (TB, V)
    onehot = (ids == iota).astype(w_ref.dtype)              # exactly one 1 per row
    out_ref[...] = jnp.dot(
        onehot, w_ref[...], preferred_element_type=jnp.float32
    ).astype(out_ref.dtype)


def _gather_loop_kernel(ids_ref, w_ref, out_ref):
    """Row-by-row gather from a VMEM-resident codebook (larger num_tokens).

    ids_ref: SMEM scalar-prefetch ref holding all (padded) flat ids.
    w_ref:   (V, Dp) resident codebook block.
    out_ref: (TB, Dp) output block.
    """
    tb = out_ref.shape[0]
    base = pl.program_id(0) * tb

    def body(j, carry):
        row = ids_ref[base + j]
        out_ref[pl.ds(j, 1), :] = w_ref[pl.ds(row, 1), :]
        return carry

    lax.fori_loop(0, tb, body, 0)


def embedding_ema_forward(embed_id: jax.Array, weight: jax.Array,
                          *, block_tokens: int = 256,
                          onehot_max_tokens: int = 4096) -> jax.Array:
    """Pallas equivalent of F.embedding(embed_id, weight) on TPU."""
    num_tokens, codebook_dim = weight.shape
    orig_shape = embed_id.shape

    # Clamp: out-of-range ids would otherwise read garbage / fault.
    ids_flat = jnp.clip(embed_id.reshape(-1).astype(jnp.int32), 0, num_tokens - 1)
    n = ids_flat.shape[0]
    if n == 0:
        return jnp.zeros((*orig_shape, codebook_dim), dtype=weight.dtype)

    # Lane-dense codebook / output: pad D to a multiple of 128.
    d_pad = _round_up(codebook_dim, 128)
    w_pad = weight if d_pad == codebook_dim else jnp.pad(
        weight, ((0, 0), (0, d_pad - codebook_dim)))

    # Sublane-dense token blocks: up to `block_tokens` per grid step.
    tb = _round_up(min(block_tokens, _round_up(n, 8)), 8)
    n_pad = _round_up(n, tb)
    ids_padded = jnp.pad(ids_flat, (0, n_pad - n))
    grid = (n_pad // tb,)

    itemsize = jnp.dtype(weight.dtype).itemsize
    codebook_bytes = num_tokens * d_pad * itemsize
    # resident codebook + double-buffered (TB, Dp) output + one-hot temp + slack
    vmem_need = (codebook_bytes
                 + 2 * tb * d_pad * itemsize
                 + tb * max(num_tokens, 128) * 4
                 + (1 << 20))

    if vmem_need > 48 * 1024 * 1024:
        # TODO(synk): codebooks too large for a VMEM-resident copy fall back to
        # XLA's native gather instead of a manual HBM-paging Pallas pipeline.
        out_flat = jnp.take(weight, ids_flat, axis=0)
        return out_flat.reshape(*orig_shape, codebook_dim)

    vmem_limit = int(min(max(2 * vmem_need, 16 * 1024 * 1024), 60 * 1024 * 1024))
    compiler_params = pltpu.CompilerParams(
        dimension_semantics=("parallel",),   # token chunks are independent
        vmem_limit_bytes=vmem_limit,
    )
    out_shape = jax.ShapeDtypeStruct((n_pad, d_pad), weight.dtype)

    if num_tokens <= onehot_max_tokens:
        # Small codebook: one-hot matmul on the MXU; ids travel as a (TB, 1)
        # VMEM block, codebook stays resident via a constant index_map.
        ids_2d = ids_padded.reshape(n_pad, 1)
        grid_spec = pltpu.PrefetchScalarGridSpec(
            num_scalar_prefetch=0,
            grid=grid,
            in_specs=[
                pl.BlockSpec((tb, 1), lambda i: (i, 0)),
                pl.BlockSpec((num_tokens, d_pad), lambda i: (0, 0)),  # resident
            ],
            out_specs=pl.BlockSpec((tb, d_pad), lambda i: (i, 0)),
        )
        out_flat = pl.pallas_call(
            _gather_onehot_kernel,
            out_shape=out_shape,
            grid_spec=grid_spec,
            compiler_params=compiler_params,
        )(ids_2d, w_pad)
    else:
        # Larger (still VMEM-resident) codebook: scalar-prefetched ids drive a
        # per-row dynamic-slice gather inside the kernel.
        grid_spec = pltpu.PrefetchScalarGridSpec(
            num_scalar_prefetch=1,
            grid=grid,
            in_specs=[
                pl.BlockSpec((num_tokens, d_pad), lambda i, ids: (0, 0)),
            ],
            out_specs=pl.BlockSpec((tb, d_pad), lambda i, ids: (i, 0)),
        )
        out_flat = pl.pallas_call(
            _gather_loop_kernel,
            out_shape=out_shape,
            grid_spec=grid_spec,
            compiler_params=compiler_params,
        )(ids_padded, w_pad)

    out_flat = out_flat[:n, :codebook_dim]
    return out_flat.reshape(*orig_shape, codebook_dim)


class EmbeddingEMA:
    """JAX port of the PyTorch EmbeddingEMA module (forward pass in Pallas)."""

    def __init__(self, num_tokens, codebook_dim, decay=0.99, eps=1e-5, key=None):
        if key is None:
            key = jax.random.PRNGKey(0)
        self.decay = decay
        self.eps = eps
        # Deterministic synthetic init (torch.randn equivalent).
        self.weight = jax.random.normal(key, (num_tokens, codebook_dim),
                                        dtype=jnp.float32)
        self.cluster_size = jnp.zeros((num_tokens,), dtype=jnp.float32)
        self.embed_avg = self.weight.copy()
        self.update = True

    def forward(self, embed_id):
        return embedding_ema_forward(embed_id, self.weight)

    # EMA bookkeeping (not part of forward; plain-JAX elementwise updates).
    def cluster_size_ema_update(self, new_cluster_size):
        self.cluster_size = (self.cluster_size * self.decay
                             + new_cluster_size * (1.0 - self.decay))

    def embed_avg_ema_update(self, new_embed_avg):
        self.embed_avg = (self.embed_avg * self.decay
                          + new_embed_avg * (1.0 - self.decay))

    def weight_update(self, num_tokens):
        n = self.cluster_size.sum()
        smoothed = (self.cluster_size + self.eps) / (n + num_tokens * self.eps) * n
        self.weight = self.embed_avg / smoothed[:, None]


if __name__ == "__main__":
    key = jax.random.PRNGKey(0)
    k_w, k_id = jax.random.split(key)

    num_tokens = 32
    codebook_dim = 128
    batch, seq = 2, 8

    module = EmbeddingEMA(num_tokens, codebook_dim, key=k_w)
    embed_id = jax.random.randint(k_id, (batch, seq), 0, num_tokens,
                                  dtype=jnp.int32)

    out = module.forward(embed_id)
    out = jax.block_until_ready(out)

    # Reference check against plain-JAX gather (same semantics as F.embedding).
    ref = jnp.take(module.weight, embed_id, axis=0)
    assert out.shape == (batch, seq, codebook_dim)
    assert jnp.allclose(out, ref), "mismatch vs reference gather"

    print("KERNEL_OK")
</pallas_src>

<mosaic_0001>
module attributes {stable_mosaic.version = 11 : i64} {
  func.func @_gather_onehot_kernel(%arg0: i32, %arg1: memref<16x1xi32, #tpu.memory_space<vmem>>, %arg2: memref<32x128xf32, #tpu.memory_space<vmem>>, %arg3: memref<16x128xf32, #tpu.memory_space<vmem>>) attributes {dimension_semantics = [#tpu.dimension_semantics<parallel>], iteration_bounds = array<i64: 1>, scalar_prefetch = 0 : i64, scratch_operands = 0 : i64, tpu.core_type = #tpu.core_type<tc>, window_params = [{transform_indices = @transform_0, window_bounds = array<i64: 16, 1>}, {pipeline_mode = #tpu.pipeline_mode<synchronous>, transform_indices = @transform_1, window_bounds = array<i64: 32, 128>}, {transform_indices = @transform_2, window_bounds = array<i64: 16, 128>}]} {
    %c0 = arith.constant 0 : index
    %c0_0 = arith.constant 0 : index
    %0 = vector.load %arg1[%c0, %c0_0] : memref<16x1xi32, #tpu.memory_space<vmem>>, vector<16x1xi32>
    %1 = tpu.iota {dimensions = array<i32: 1>} : vector<16x32xi32>
    %2 = vector.broadcast %0 : vector<16x1xi32> to vector<16x32xi32>
    %3 = arith.cmpi eq, %2, %1 : vector<16x32xi32>
    %4 = arith.extui %3 : vector<16x32xi1> to vector<16x32xi32>
    %5 = arith.sitofp %4 : vector<16x32xi32> to vector<16x32xf32>
    %c0_1 = arith.constant 0 : index
    %c0_2 = arith.constant 0 : index
    %6 = vector.load %arg2[%c0_1, %c0_2] : memref<32x128xf32, #tpu.memory_space<vmem>>, vector<32x128xf32>
    %cst = arith.constant dense<0.000000e+00> : vector<16x128xf32>
    %7 = tpu.matmul %5, %6, %cst {dimension_numbers = #tpu.dot_dimension_numbers<[1], [0], [0], [1], [0, 0, 1, 1], [], []>} : vector<16x32xf32>, vector<32x128xf32>, vector<16x128xf32> -> vector<16x128xf32>
    %c0_3 = arith.constant 0 : index
    %c0_4 = arith.constant 0 : index
    %8 = vector.load %arg3[%c0_3, %c0_4] : memref<16x128xf32, #tpu.memory_space<vmem>>, vector<16x128xf32>
    tpu.vector_store %arg3[%c0_3, %c0_4], %7 {strides = array<i32>} : memref<16x128xf32, #tpu.memory_space<vmem>>, vector<16x128xf32>,
    return
  }
  func.func @transform_0(%arg0: i32) -> (i32, i32) {
    %c0_i32 = arith.constant 0 : i32
    %c0_i32_0 = arith.constant 0 : i32
    return %arg0, %c0_i32 : i32, i32
  }
  func.func @transform_1(%arg0: i32) -> (i32, i32) {
    %c0_i32 = arith.constant 0 : i32
    %c0_i32_0 = arith.constant 0 : i32
    %c0_i32_1 = arith.constant 0 : i32
    return %c0_i32, %c0_i32_0 : i32, i32
  }
  func.func @transform_2(%arg0: i32) -> (i32, i32) {
    %c0_i32 = arith.constant 0 : i32
    %c0_i32_0 = arith.constant 0 : i32
    return %arg0, %c0_i32 : i32, i32
  }
}

</mosaic_0001>

<llo_original>
// kernel: tpu_custom_call.1
$region0: #{tpu_custom_call.1}
  #allocation0 [shape = 'u32[]', space=smem, size = 0x4, offset = 0x4, fixed_abs, tag = 'smem constant byte address 0x4 - core index']
  #allocation1 [shape = 'u32[144,128]{1,0:T(1,128)}', space=vmem, size = 0x12000, scoped, tag = 'internal scratch']
  %s0 = inlined_call_operand.vmem [shape: s32[16,1], index: 0, kind: input, shape index: {}]
  %s1 = inlined_call_operand.hbm [shape: f32[32,128], index: 1, kind: input, shape index: {}]
  %s2 = inlined_call_operand.hbm [shape: f32[16,128], index: 2, kind: output, shape index: {}]
  %s3 = sld [smem:[#allocation0]]
  $region22: #{tpu_custom_call.1} parent=0
    _
  %s5 = ssub.s32 1, %s3
  %s6 = scalar_select 0, %s5, %s3
  $region1: #{tpu_custom_call.1} parent=0
    #allocation2 [shape = 'u8[16384]{0}', space=vmem, size = 0x4000, scoped, tag = 'input window, operand 1, single buffered']
    #allocation3 [shape = 's32[1]{0}', space=sflag, size = 0x4, scoped, tag = 'scoped memory for tpu_custom_call.1']
    #allocation4 [shape = 's32[1]{0}', space=sflag, size = 0x4, scoped, tag = 'scoped memory for tpu_custom_call.1']
    #allocation5 [shape = 'u8[8192]{0}', space=vmem, size = 0x2000, scoped, tag = 'output window, operand 0, single buffered']
    %7 = vsyncpa [#allocation3], 0
    %8 = vsyncpa [#allocation4], 0
    // Predicated region
    $region2: #{tpu_custom_call.1} parent=1 // pred_check
      _
    $region3: #{tpu_custom_call.1} parent=1 // pred_check_branch
      %10 = sbr.rel (0) target = $region5
    $region4: #{tpu_custom_call.1} parent=1 // pred_region
      _
    $region5: #{tpu_custom_call.1} parent=1 // pred_fallthru
      _
    // Predicated region
    $region6: #{tpu_custom_call.1} parent=1 // pred_check
      _
    $region7: #{tpu_custom_call.1} parent=1 // pred_check_branch
      %12 = sbr.rel (0) target = $region9
    $region8: #{tpu_custom_call.1} parent=1 // pred_region
      %s14 = ssub.s32 512, 512
      %15 = vsyncadd [#allocation3], %s14
      %s16 = sshll.u32 [#allocation2], 4
      %s17 = int_to_ptr.vmem [resolvable:$true] %s16
      %22 = dma.hbm_to_vmem [thread:$0]  %s1, 512, %s17, [#allocation3], 128, 128, 8
    $region9: #{tpu_custom_call.1} parent=1 // pred_fallthru
      _
    // Predicated region
    $region10: #{tpu_custom_call.1} parent=1 // pred_check
      _
    $region11: #{tpu_custom_call.1} parent=1 // pred_check_branch
      %24 = sbr.rel (0) target = $region13
    $region12: #{tpu_custom_call.1} parent=1 // pred_region
      %25 = dma.done [#allocation3], 512
    $region13: #{tpu_custom_call.1} parent=1 // pred_fallthru
      _
    %v26 = vld [vmem:[%s0] sm:$0xff]
    %v27 = vld [vmem:[%s0 + $0x8] sm:$0xff]
    %v28 = vlaneseq
    %v29 = vand.u32 %v28, 127
    %30 = vset.pattern.permute.xlu0 0
    %31 = vperm.xlu0 %30, %v26
    %v32 = vpop.permute.xlu0 %31
    %33 = vset.pattern.permute.xlu0 0
    %34 = vperm.xlu0 %33, %v27
    %v35 = vpop.permute.xlu0 %34
    %vm36 = vcmp.eq.s32.totalorder %v32, %v29
    %vm37 = vcmp.eq.s32.totalorder %v35, %v29
    %v38 = vsel %vm36, 1, 0
    %v39 = vsel %vm37, 1, 0
    %v40 = vcvt.s32.f32 %v38
    %v41 = vcvt.s32.f32 %v39
    %v42 = vld [vmem:[#allocation2] sm:$0xff]
    %v43 = vld [vmem:[#allocation2 + $0x8] sm:$0xff]
    %v44 = vld [vmem:[#allocation2 + $0x10] sm:$0xff]
    %v45 = vld [vmem:[#allocation2 + $0x18] sm:$0xff]
    %vm46 = vcmask 261120
    %v48 = vsel %vm46, %v40, 0
    %v51 = vsel %vm46, %v41, 0
    %53 = vmatprep.subr.mxu0 0.0
    %54 = vmatpush1.msra.mxu0 0.0
    %55 = vmatprep.subr.mxu0 0.0
    %56 = vmatpush1.msra.mxu0 0.0
    %57 = vmatprep.subr.mxu0 0.0
    %58 = vmatpush1.msra.mxu0 0.0
    %59 = vmatprep.subr.mxu0 0.0
    %60 = vmatpush1.msra.mxu0 0.0
    %61 = vmatprep.subr.mxu0 0.0
    %62 = vmatpush1.msra.mxu0 0.0
    %63 = vmatprep.subr.mxu0 0.0
    %64 = vmatpush1.msra.mxu0 0.0
    %65 = vmatprep.subr.mxu0 0.0
    %66 = vmatpush1.msra.mxu0 0.0
    %67 = vmatprep.subr.mxu0 0.0
    %68 = vmatpush1.msra.mxu0 0.0
    %69 = vmatprep.subr.mxu0 0.0
    %70 = vmatpush1.msra.mxu0 0.0
    %71 = vmatprep.subr.mxu0 0.0
    %72 = vmatpush1.msra.mxu0 0.0
    %73 = vmatprep.subr.mxu0 0.0
    %74 = vmatpush1.msra.mxu0 0.0
    %75 = vmatprep.subr.mxu0 0.0
    %76 = vmatpush1.msra.mxu0 0.0
    %77 = vmatprep.subr.mxu0 0.0
    %78 = vmatpush1.msra.mxu0 %v45
    %79 = vmatprep.subr.mxu0 0.0
    %80 = vmatpush1.msra.mxu0 %v44
    %81 = vmatprep.subr.mxu0 0.0
    %82 = vmatpush1.msra.mxu0 %v43
    %83 = vmatprep.subr.mxu0 0.0
    %84 = vmatpush1.msra.mxu0 %v42
    %85 = vmatprep.subr.mxu0 0.0
    %86 = vmatpush2.msra.mxu0 0.0
    %87 = vmatprep.subr.mxu0 0.0
    %88 = vmatpush2.msra.mxu0 0.0
    %89 = vmatprep.subr.mxu0 0.0
    %90 = vmatpush2.msra.mxu0 0.0
    %91 = vmatprep.subr.mxu0 0.0
    %92 = vmatpush2.msra.mxu0 0.0
    %93 = vmatprep.subr.mxu0 0.0
    %94 = vmatpush2.msra.mxu0 0.0
    %95 = vmatprep.subr.mxu0 0.0
    %96 = vmatpush2.msra.mxu0 0.0
    %97 = vmatprep.subr.mxu0 0.0
    %98 = vmatpush2.msra.mxu0 0.0
    %99 = vmatprep.subr.mxu0 0.0
    %100 = vmatpush2.msra.mxu0 0.0
    %101 = vmatprep.subr.mxu0 0.0
    %102 = vmatpush2.msra.mxu0 0.0
    %103 = vmatprep.subr.mxu0 0.0
    %104 = vmatpush2.msra.mxu0 0.0
    %105 = vmatprep.subr.mxu0 0.0
    %106 = vmatpush2.msra.mxu0 0.0
    %107 = vmatprep.subr.mxu0 0.0
    %108 = vmatpush2.msra.mxu0 0.0
    %109 = vmatprep.subr.mxu0 0.0
    %110 = vmatpush2.msra.mxu0 0.0
    %111 = vmatprep.subr.mxu0 0.0
    %112 = vmatpush2.msra.mxu0 0.0
    %113 = vmatprep.subr.mxu0 0.0
    %114 = vmatpush2.msra.mxu0 0.0
    %115 = vmatprep.subr.mxu0 0.0
    %116 = vmatpush2.msra.mxu0 0.0
    %117 = vmatprep.mubr.f32.mxu0 0.0
    %118 = vmatmul.mubr.f32.gmra.mxu0 %v48
    %v119 = vpop.f32.mrf.mxu0
    %v120 = vadd.f32 0.0, %v119
    %v121 = vpop.f32.mrf.mxu0
    %122 = vmatprep.mubr.f32.mxu0 0.0
    %123 = vmatmul.mubr.f32.gmra.mxu0 %v51
    %v124 = vpop.f32.mrf.mxu0
    %v125 = vadd.f32 0.0, %v124
    %v126 = vpop.f32.mrf.mxu0
    %127 = vdwg.mxu0
    %128 = vst [vmem:[#allocation5] sm:$0xff] %v120
    %129 = vst [vmem:[#allocation5 + $0x8] sm:$0xff] %v125
    // Predicated region
    $region14: #{tpu_custom_call.1} parent=1 // pred_check
      _
    $region15: #{tpu_custom_call.1} parent=1 // pred_check_branch
      %131 = sbr.rel (0) target = $region17
    $region16: #{tpu_custom_call.1} parent=1 // pred_region
      %s133 = ssub.s32 256, 256
      %134 = vsyncadd [#allocation4], %s133
      %s135 = sshll.u32 [#allocation5], 4
      %s136 = int_to_ptr.vmem [resolvable:$true] %s135
      %141 = dma.vmem_to_hbm [thread:$0]  %s136, 256, %s2, [#allocation4], 128, 128, 8
    $region17: #{tpu_custom_call.1} parent=1 // pred_fallthru
      _
    // Predicated region
    $region18: #{tpu_custom_call.1} parent=1 // pred_check
      _
    $region19: #{tpu_custom_call.1} parent=1 // pred_check_branch
      %143 = sbr.rel (0) target = $region21
    $region20: #{tpu_custom_call.1} parent=1 // pred_region
      %144 = dma.done [#allocation4], 256
    $region21: #{tpu_custom_call.1} parent=1 // pred_fallthru
      _
    %145 = vsyncpa [#allocation3], 1
    %146 = vsyncpa [#allocation4], 1

</llo_original>
